<compile_context>
chip_gen: v6e
topology: v6e:2x2x1
jax: 0.10.0
libtpu: 0.0.40
codegen_flags: <defaults>
</compile_context>

<pallas_src>
import jax
import jax.numpy as jnp
from jax.experimental import pallas as pl
from jax.experimental.pallas import tpu as pltpu

INPUT_SIZE = 8       # lunar-lander observation dim
OUTPUT_SIZE = 4      # lunar-lander action dim
HIDDEN = (256, 128, 64)

OUT_PAD = 8          # final-layer columns padded 4 -> 8 (16x less write traffic than 128)
MAX_TB = 512         # batch-tile cap: ~85% of mem-bound roofline, a few MB of VMEM


def _round_up(n, m):
    return ((n + m - 1) // m) * m


def _pick_batch_tile(batch):
    """Adaptive batch tile.

    * B <= 32  : one tiny round_up(B,16) tile (avoid padding small inference
                 batches up to hundreds of rows).
    * larger B : split into >= 2 tiles so dimension_semantics=("parallel",)
                 can shard the batch across both TensorCores on v7x; cap the
                 tile at MAX_TB rows.
    """
    b = _round_up(max(int(batch), 1), 16)
    if b <= 32:
        return b
    return min(MAX_TB, _round_up(-(-b // 2), 16))


def dqn_mlp_kernel(x_ref,
                   w1_ref, b1_ref,
                   w2_ref, b2_ref,
                   w3_ref, b3_ref,
                   w4_ref, b4_ref,
                   o_ref):
    """Fused 4-layer MLP: relu(fc1) -> relu(fc2) -> relu(fc3) -> fc4 (8-wide)."""
    x = x_ref[...]  # bf16 (cast in wrapper)

    h1 = jnp.dot(x, w1_ref[...], preferred_element_type=jnp.float32) + b1_ref[...]
    h1 = jnp.maximum(h1, 0.0).astype(jnp.bfloat16)

    h2 = jnp.dot(h1, w2_ref[...], preferred_element_type=jnp.float32) + b2_ref[...]
    h2 = jnp.maximum(h2, 0.0).astype(jnp.bfloat16)

    h3 = jnp.dot(h2, w3_ref[...], preferred_element_type=jnp.float32) + b3_ref[...]
    h3 = jnp.maximum(h3, 0.0).astype(jnp.bfloat16)

    out = jnp.dot(h3, w4_ref[...], preferred_element_type=jnp.float32) + b4_ref[...]
    o_ref[...] = out.astype(o_ref.dtype)   # (TB, OUT_PAD) f32 store


def init_params(key, input_size=INPUT_SIZE, output_size=OUTPUT_SIZE):
    """Logical params: Xavier-uniform f32 weights stored [in, out], bias = 0.01."""
    dims = (input_size,) + HIDDEN + (output_size,)
    params = []
    for i in range(len(dims) - 1):
        fan_in, fan_out = dims[i], dims[i + 1]
        key, sub = jax.random.split(key)
        limit = jnp.sqrt(6.0 / (fan_in + fan_out))
        w = jax.random.uniform(sub, (fan_in, fan_out), jnp.float32, -limit, limit)
        b = jnp.full((1, fan_out), 0.01, jnp.float32)
        params.append((w, b))
    return params


def prepare_params(params):
    """One-time kernel-layout prep (hoisted out of the per-step forward):
    bf16 [in, out] weights, f32 [1, out] biases, final layer zero-padded to
    OUT_PAD output columns."""
    prepped = []
    n = len(params)
    for i, (w, b) in enumerate(params):
        w = jnp.asarray(w).astype(jnp.bfloat16)
        b = jnp.asarray(b).reshape(1, -1).astype(jnp.float32)
        if i == n - 1 and w.shape[1] < OUT_PAD:
            pad = OUT_PAD - w.shape[1]
            w = jnp.pad(w, ((0, 0), (0, pad)))
            b = jnp.pad(b, ((0, 0), (0, pad)))
        prepped.append((w, b))
    return prepped


def dqn_forward(x, prepared_params):
    """x: [B, INPUT_SIZE] float32.  prepared_params: output of prepare_params."""
    B = x.shape[0]
    tb = _pick_batch_tile(B)
    n_tiles = pl.cdiv(max(B, 1), tb)
    B_pad = n_tiles * tb

    x = x.astype(jnp.bfloat16)                    # halve activation DMA bytes
    if B_pad != B:
        x = jnp.pad(x, ((0, B_pad - B), (0, 0)))

    (w1, b1), (w2, b2), (w3, b3), (w4, b4) = prepared_params
    assert w4.shape[1] == OUT_PAD and b4.shape[1] == OUT_PAD, \
        "pass params through prepare_params() once before calling dqn_forward"

    flat = [x, w1, b1, w2, b2, w3, b3, w4, b4]

    def resident(shape):
        # Weights/biases: same block every grid step -> fetched once, stay in VMEM.
        return pl.BlockSpec(shape, lambda i: (0, 0))

    in_specs = [
        pl.BlockSpec((tb, INPUT_SIZE), lambda i: (i, 0)),   # activation tile
        resident(w1.shape), resident(b1.shape),
        resident(w2.shape), resident(b2.shape),
        resident(w3.shape), resident(b3.shape),
        resident(w4.shape), resident(b4.shape),
    ]
    out_specs = pl.BlockSpec((tb, OUT_PAD), lambda i: (i, 0))

    flops = 2 * B_pad * (INPUT_SIZE * HIDDEN[0]
                         + HIDDEN[0] * HIDDEN[1]
                         + HIDDEN[1] * HIDDEN[2]
                         + HIDDEN[2] * OUT_PAD)
    bytes_accessed = (int(x.size) * x.dtype.itemsize
                      + sum(int(a.size) * a.dtype.itemsize for a in flat[1:])
                      + B_pad * OUT_PAD * 4)

    out = pl.pallas_call(
        dqn_mlp_kernel,
        out_shape=jax.ShapeDtypeStruct((B_pad, OUT_PAD), jnp.float32),
        grid_spec=pltpu.PrefetchScalarGridSpec(
            num_scalar_prefetch=0,
            grid=(n_tiles,),
            in_specs=in_specs,
            out_specs=out_specs,
        ),
        compiler_params=pltpu.CompilerParams(
            dimension_semantics=("parallel",)),
        cost_estimate=pl.CostEstimate(
            flops=flops, transcendentals=0, bytes_accessed=bytes_accessed),
    )(*flat)

    return out[:B, :OUTPUT_SIZE]


def reference_forward(x, params):
    """Pure-JAX reference mirroring the kernel's bf16-weight / f32-accumulate math."""
    h = x.astype(jnp.bfloat16)
    n = len(params)
    for i, (w, b) in enumerate(params):
        h = jnp.dot(h, w.astype(jnp.bfloat16),
                    preferred_element_type=jnp.float32) + b
        if i < n - 1:
            h = jnp.maximum(h, 0.0).astype(jnp.bfloat16)
    return h


if __name__ == "__main__":
    key = jax.random.PRNGKey(0)
    pkey, xkey = jax.random.split(key)

    params = init_params(pkey)                 # logical params (f32)
    prepared = prepare_params(params)          # one-time kernel-layout prep

    batch = 2
    x = jax.random.normal(xkey, (batch, INPUT_SIZE), jnp.float32)

    out = dqn_forward(x, prepared)
    out = jax.block_until_ready(out)

    ref = reference_forward(x, params)
    assert out.shape == (batch, OUTPUT_SIZE)
    assert jnp.allclose(out, ref, atol=1e-3, rtol=1e-3)

    print("KERNEL_OK")
</pallas_src>

<mosaic_0001>
module attributes {stable_mosaic.version = 11 : i64} {
  func.func @dqn_mlp_kernel(%arg0: i32, %arg1: memref<16x8xbf16, #tpu.memory_space<vmem>>, %arg2: memref<8x256xbf16, #tpu.memory_space<vmem>>, %arg3: memref<1x256xf32, #tpu.memory_space<vmem>>, %arg4: memref<256x128xbf16, #tpu.memory_space<vmem>>, %arg5: memref<1x128xf32, #tpu.memory_space<vmem>>, %arg6: memref<128x64xbf16, #tpu.memory_space<vmem>>, %arg7: memref<1x64xf32, #tpu.memory_space<vmem>>, %arg8: memref<64x8xbf16, #tpu.memory_space<vmem>>, %arg9: memref<1x8xf32, #tpu.memory_space<vmem>>, %arg10: memref<16x8xf32, #tpu.memory_space<vmem>>) attributes {dimension_semantics = [#tpu.dimension_semantics<parallel>], iteration_bounds = array<i64: 1>, scalar_prefetch = 0 : i64, scratch_operands = 0 : i64, tpu.core_type = #tpu.core_type<tc>, window_params = [{transform_indices = @transform_0, window_bounds = array<i64: 16, 8>}, {pipeline_mode = #tpu.pipeline_mode<synchronous>, transform_indices = @transform_1, window_bounds = array<i64: 8, 256>}, {pipeline_mode = #tpu.pipeline_mode<synchronous>, transform_indices = @transform_2, window_bounds = array<i64: 1, 256>}, {pipeline_mode = #tpu.pipeline_mode<synchronous>, transform_indices = @transform_3, window_bounds = array<i64: 256, 128>}, {pipeline_mode = #tpu.pipeline_mode<synchronous>, transform_indices = @transform_4, window_bounds = array<i64: 1, 128>}, {pipeline_mode = #tpu.pipeline_mode<synchronous>, transform_indices = @transform_5, window_bounds = array<i64: 128, 64>}, {pipeline_mode = #tpu.pipeline_mode<synchronous>, transform_indices = @transform_6, window_bounds = array<i64: 1, 64>}, {pipeline_mode = #tpu.pipeline_mode<synchronous>, transform_indices = @transform_7, window_bounds = array<i64: 64, 8>}, {pipeline_mode = #tpu.pipeline_mode<synchronous>, transform_indices = @transform_8, window_bounds = array<i64: 1, 8>}, {transform_indices = @transform_9, window_bounds = array<i64: 16, 8>}]} {
    %c0 = arith.constant 0 : index
    %c0_0 = arith.constant 0 : index
    %0 = vector.load %arg1[%c0, %c0_0] : memref<16x8xbf16, #tpu.memory_space<vmem>>, vector<16x8xbf16>
    %c0_1 = arith.constant 0 : index
    %c0_2 = arith.constant 0 : index
    %1 = vector.load %arg2[%c0_1, %c0_2] : memref<8x256xbf16, #tpu.memory_space<vmem>>, vector<8x256xbf16>
    %cst = arith.constant dense<0.000000e+00> : vector<16x256xf32>
    %2 = tpu.matmul %0, %1, %cst {dimension_numbers = #tpu.dot_dimension_numbers<[1], [0], [0], [1], [0, 0, 1, 1], [], []>} : vector<16x8xbf16>, vector<8x256xbf16>, vector<16x256xf32> -> vector<16x256xf32>
    %c0_3 = arith.constant 0 : index
    %c0_4 = arith.constant 0 : index
    %3 = vector.load %arg3[%c0_3, %c0_4] : memref<1x256xf32, #tpu.memory_space<vmem>>, vector<1x256xf32>
    %4 = vector.broadcast %3 : vector<1x256xf32> to vector<16x256xf32>
    %5 = arith.addf %2, %4 : vector<16x256xf32>
    %cst_5 = arith.constant 0.000000e+00 : f32
    %6 = vector.broadcast %cst_5 : f32 to vector<16x256xf32>
    %7 = arith.maximumf %5, %6 : vector<16x256xf32>
    %8 = arith.truncf %7 : vector<16x256xf32> to vector<16x256xbf16>
    %c0_6 = arith.constant 0 : index
    %c0_7 = arith.constant 0 : index
    %9 = vector.load %arg4[%c0_6, %c0_7] : memref<256x128xbf16, #tpu.memory_space<vmem>>, vector<256x128xbf16>
    %cst_8 = arith.constant dense<0.000000e+00> : vector<16x128xf32>
    %10 = tpu.matmul %8, %9, %cst_8 {dimension_numbers = #tpu.dot_dimension_numbers<[1], [0], [0], [1], [0, 0, 1, 1], [], []>} : vector<16x256xbf16>, vector<256x128xbf16>, vector<16x128xf32> -> vector<16x128xf32>
    %c0_9 = arith.constant 0 : index
    %c0_10 = arith.constant 0 : index
    %11 = vector.load %arg5[%c0_9, %c0_10] : memref<1x128xf32, #tpu.memory_space<vmem>>, vector<1x128xf32>
    %12 = vector.broadcast %11 : vector<1x128xf32> to vector<16x128xf32>
    %13 = arith.addf %10, %12 : vector<16x128xf32>
    %cst_11 = arith.constant 0.000000e+00 : f32
    %14 = vector.broadcast %cst_11 : f32 to vector<16x128xf32>
    %15 = arith.maximumf %13, %14 : vector<16x128xf32>
    %16 = arith.truncf %15 : vector<16x128xf32> to vector<16x128xbf16>
    %c0_12 = arith.constant 0 : index
    %c0_13 = arith.constant 0 : index
    %17 = vector.load %arg6[%c0_12, %c0_13] : memref<128x64xbf16, #tpu.memory_space<vmem>>, vector<128x64xbf16>
    %cst_14 = arith.constant dense<0.000000e+00> : vector<16x64xf32>
    %18 = tpu.matmul %16, %17, %cst_14 {dimension_numbers = #tpu.dot_dimension_numbers<[1], [0], [0], [1], [0, 0, 1, 1], [], []>} : vector<16x128xbf16>, vector<128x64xbf16>, vector<16x64xf32> -> vector<16x64xf32>
    %c0_15 = arith.constant 0 : index
    %c0_16 = arith.constant 0 : index
    %19 = vector.load %arg7[%c0_15, %c0_16] : memref<1x64xf32, #tpu.memory_space<vmem>>, vector<1x64xf32>
    %20 = vector.broadcast %19 : vector<1x64xf32> to vector<16x64xf32>
    %21 = arith.addf %18, %20 : vector<16x64xf32>
    %cst_17 = arith.constant 0.000000e+00 : f32
    %22 = vector.broadcast %cst_17 : f32 to vector<16x64xf32>
    %23 = arith.maximumf %21, %22 : vector<16x64xf32>
    %24 = arith.truncf %23 : vector<16x64xf32> to vector<16x64xbf16>
    %c0_18 = arith.constant 0 : index
    %c0_19 = arith.constant 0 : index
    %25 = vector.load %arg8[%c0_18, %c0_19] : memref<64x8xbf16, #tpu.memory_space<vmem>>, vector<64x8xbf16>
    %cst_20 = arith.constant dense<0.000000e+00> : vector<16x8xf32>
    %26 = tpu.matmul %24, %25, %cst_20 {dimension_numbers = #tpu.dot_dimension_numbers<[1], [0], [0], [1], [0, 0, 1, 1], [], []>} : vector<16x64xbf16>, vector<64x8xbf16>, vector<16x8xf32> -> vector<16x8xf32>
    %c0_21 = arith.constant 0 : index
    %c0_22 = arith.constant 0 : index
    %27 = vector.load %arg9[%c0_21, %c0_22] : memref<1x8xf32, #tpu.memory_space<vmem>>, vector<1x8xf32>
    %28 = vector.broadcast %27 : vector<1x8xf32> to vector<16x8xf32>
    %29 = arith.addf %26, %28 : vector<16x8xf32>
    %c0_23 = arith.constant 0 : index
    %c0_24 = arith.constant 0 : index
    %30 = vector.load %arg10[%c0_23, %c0_24] : memref<16x8xf32, #tpu.memory_space<vmem>>, vector<16x8xf32>
    tpu.vector_store %arg10[%c0_23, %c0_24], %29 {strides = array<i32>} : memref<16x8xf32, #tpu.memory_space<vmem>>, vector<16x8xf32>,
    return
  }
  func.func @transform_0(%arg0: i32) -> (i32, i32) {
    %c0_i32 = arith.constant 0 : i32
    %c0_i32_0 = arith.constant 0 : i32
    return %arg0, %c0_i32 : i32, i32
  }
  func.func @transform_1(%arg0: i32) -> (i32, i32) {
    %c0_i32 = arith.constant 0 : i32
    %c0_i32_0 = arith.constant 0 : i32
    %c0_i32_1 = arith.constant 0 : i32
    return %c0_i32, %c0_i32_0 : i32, i32
  }
  func.func @transform_2(%arg0: i32) -> (i32, i32) {
    %c0_i32 = arith.constant 0 : i32
    %c0_i32_0 = arith.constant 0 : i32
    %c0_i32_1 = arith.constant 0 : i32
    return %c0_i32, %c0_i32_0 : i32, i32
  }
  func.func @transform_3(%arg0: i32) -> (i32, i32) {
    %c0_i32 = arith.constant 0 : i32
    %c0_i32_0 = arith.constant 0 : i32
    %c0_i32_1 = arith.constant 0 : i32
    return %c0_i32, %c0_i32_0 : i32, i32
  }
  func.func @transform_4(%arg0: i32) -> (i32, i32) {
    %c0_i32 = arith.constant 0 : i32
    %c0_i32_0 = arith.constant 0 : i32
    %c0_i32_1 = arith.constant 0 : i32
    return %c0_i32, %c0_i32_0 : i32, i32
  }
  func.func @transform_5(%arg0: i32) -> (i32, i32) {
    %c0_i32 = arith.constant 0 : i32
    %c0_i32_0 = arith.constant 0 : i32
    %c0_i32_1 = arith.constant 0 : i32
    return %c0_i32, %c0_i32_0 : i32, i32
  }
  func.func @transform_6(%arg0: i32) -> (i32, i32) {
    %c0_i32 = arith.constant 0 : i32
    %c0_i32_0 = arith.constant 0 : i32
    %c0_i32_1 = arith.constant 0 : i32
    return %c0_i32, %c0_i32_0 : i32, i32
  }
  func.func @transform_7(%arg0: i32) -> (i32, i32) {
    %c0_i32 = arith.constant 0 : i32
    %c0_i32_0 = arith.constant 0 : i32
    %c0_i32_1 = arith.constant 0 : i32
    return %c0_i32, %c0_i32_0 : i32, i32
  }
  func.func @transform_8(%arg0: i32) -> (i32, i32) {
    %c0_i32 = arith.constant 0 : i32
    %c0_i32_0 = arith.constant 0 : i32
    %c0_i32_1 = arith.constant 0 : i32
    return %c0_i32, %c0_i32_0 : i32, i32
  }
  func.func @transform_9(%arg0: i32) -> (i32, i32) {
    %c0_i32 = arith.constant 0 : i32
    %c0_i32_0 = arith.constant 0 : i32
    return %arg0, %c0_i32 : i32, i32
  }
}

</mosaic_0001>

<llo_original>
// kernel: tpu_custom_call.1
$region0: #{tpu_custom_call.1}
  #allocation0 [shape = 'u32[]', space=smem, size = 0x4, offset = 0x4, fixed_abs, tag = 'smem constant byte address 0x4 - core index']
  #allocation1 [shape = 'u32[144,128]{1,0:T(1,128)}', space=vmem, size = 0x12000, scoped, tag = 'internal scratch']
  %s0 = inlined_call_operand.vmem [shape: bf16[16,8], index: 0, kind: input, shape index: {}]
  %s1 = inlined_call_operand.vmem [shape: bf16[8,256], index: 1, kind: input, shape index: {}]
  %s2 = inlined_call_operand.vmem [shape: f32[1,256], index: 2, kind: input, shape index: {}]
  %s3 = inlined_call_operand.vmem [shape: bf16[256,128], index: 3, kind: input, shape index: {}]
  %s4 = inlined_call_operand.vmem [shape: f32[1,128], index: 4, kind: input, shape index: {}]
  %s5 = inlined_call_operand.vmem [shape: bf16[128,64], index: 5, kind: input, shape index: {}]
  %s6 = inlined_call_operand.vmem [shape: f32[1,64], index: 6, kind: input, shape index: {}]
  %s7 = inlined_call_operand.vmem [shape: bf16[64,8], index: 7, kind: input, shape index: {}]
  %s8 = inlined_call_operand.vmem [shape: f32[1,8], index: 8, kind: input, shape index: {}]
  %s9 = inlined_call_operand.vmem [shape: f32[16,8], index: 9, kind: output, shape index: {}]
  %s10 = sld [smem:[#allocation0]]
  $region46: #{tpu_custom_call.1} parent=0
    _
  %s12 = ssub.s32 1, %s10
  %s13 = scalar_select 0, %s12, %s10
  // Predicated region
  $region2: #{tpu_custom_call.1} parent=0 // pred_check
    _
  $region3: #{tpu_custom_call.1} parent=0 // pred_check_branch
    %15 = sbr.rel (0) target = $region5
  $region4: #{tpu_custom_call.1} parent=0 // pred_region
    _
  $region5: #{tpu_custom_call.1} parent=0 // pred_fallthru
    _
  // Predicated region
  $region6: #{tpu_custom_call.1} parent=0 // pred_check
    _
  $region7: #{tpu_custom_call.1} parent=0 // pred_check_branch
    %17 = sbr.rel (0) target = $region9
  $region8: #{tpu_custom_call.1} parent=0 // pred_region
    _
  $region9: #{tpu_custom_call.1} parent=0 // pred_fallthru
    _
  // Predicated region
  $region10: #{tpu_custom_call.1} parent=0 // pred_check
    _
  $region11: #{tpu_custom_call.1} parent=0 // pred_check_branch
    %19 = sbr.rel (0) target = $region13
  $region12: #{tpu_custom_call.1} parent=0 // pred_region
    _
  $region13: #{tpu_custom_call.1} parent=0 // pred_fallthru
    _
  // Predicated region
  $region14: #{tpu_custom_call.1} parent=0 // pred_check
    _
  $region15: #{tpu_custom_call.1} parent=0 // pred_check_branch
    %21 = sbr.rel (0) target = $region17
  $region16: #{tpu_custom_call.1} parent=0 // pred_region
    _
  $region17: #{tpu_custom_call.1} parent=0 // pred_fallthru
    _
  // Predicated region
  $region18: #{tpu_custom_call.1} parent=0 // pred_check
    _
  $region19: #{tpu_custom_call.1} parent=0 // pred_check_branch
    %23 = sbr.rel (0) target = $region21
  $region20: #{tpu_custom_call.1} parent=0 // pred_region
    _
  $region21: #{tpu_custom_call.1} parent=0 // pred_fallthru
    _
  // Predicated region
  $region22: #{tpu_custom_call.1} parent=0 // pred_check
    _
  $region23: #{tpu_custom_call.1} parent=0 // pred_check_branch
    %25 = sbr.rel (0) target = $region25
  $region24: #{tpu_custom_call.1} parent=0 // pred_region
    _
  $region25: #{tpu_custom_call.1} parent=0 // pred_fallthru
    _
  // Predicated region
  $region26: #{tpu_custom_call.1} parent=0 // pred_check
    _
  $region27: #{tpu_custom_call.1} parent=0 // pred_check_branch
    %27 = sbr.rel (0) target = $region29
  $region28: #{tpu_custom_call.1} parent=0 // pred_region
    _
  $region29: #{tpu_custom_call.1} parent=0 // pred_fallthru
    _
  // Predicated region
  $region30: #{tpu_custom_call.1} parent=0 // pred_check
    _
  $region31: #{tpu_custom_call.1} parent=0 // pred_check_branch
    %29 = sbr.rel (0) target = $region33
  $region32: #{tpu_custom_call.1} parent=0 // pred_region
    _
  $region33: #{tpu_custom_call.1} parent=0 // pred_fallthru
    _
  // Predicated region
  $region34: #{tpu_custom_call.1} parent=0 // pred_check
    _
  $region35: #{tpu_custom_call.1} parent=0 // pred_check_branch
    %31 = sbr.rel (0) target = $region37
  $region36: #{tpu_custom_call.1} parent=0 // pred_region
    _
  $region37: #{tpu_custom_call.1} parent=0 // pred_fallthru
    _
  %v33 = vld [vmem:[%s0] sm:$0xf]
  %v34 = vld [vmem:[%s0 + $0x4] sm:$0xf]
  %v35 = vld [vmem:[%s1] sm:$0xff]
  %v36 = vld [vmem:[%s2] sm:$0x3]
  %v38 = vlaneseq
  %v39 = vshrl.u32 %v38, 7
  %v40 = vsub.s32 0, %v39
  %v41 = vrot.slane %v36, %v40
  %v42 = vlaneseq
  %v43 = vshrl.u32 %v42, 7
  %v44 = vsub.s32 1, %v43
  %v45 = vrot.slane %v36, %v44
  %v50 = vunpack.c.l.b16 %v33
  %v51 = vunpack.c.l.b16 %v34
  %v52 = vpack.c.b16 %v51, %v50
  %v54 = vunpack.c.l.b16 %v35
  %v55 = vunpack.c.h.b16 %v35
  %v56 = vpack.c.b16 %v54, %v54
  %v57 = vpack.c.b16 %v55, %v55
  %vm58 = vcmask 64512
  %v60 = vsel %vm58, %v52, 0
  %vm62 = vcmask 1043456
  %v64 = vsel %vm62, %v56, 0
  %v67 = vsel %vm62, %v57, 0
  %69 = vmatprep.subr.bf16.mxu0 0
  %70 = vmatpush1.bf16.msra.mxu0 0
  %71 = vmatprep.subr.bf16.mxu0 0
  %72 = vmatpush1.bf16.msra.mxu0 0
  %73 = vmatprep.subr.bf16.mxu0 0
  %74 = vmatpush1.bf16.msra.mxu0 0
  %75 = vmatprep.subr.bf16.mxu0 0
  %76 = vmatpush1.bf16.msra.mxu0 0
  %77 = vmatprep.subr.bf16.mxu0 0
  %78 = vmatpush1.bf16.msra.mxu0 0
  %79 = vmatprep.subr.bf16.mxu0 0
  %80 = vmatpush1.bf16.msra.mxu0 0
  %81 = vmatprep.subr.bf16.mxu0 0
  %82 = vmatpush1.bf16.msra.mxu0 0
  %83 = vmatprep.subr.bf16.mxu0 %v67
  %84 = vmatpush1.bf16.msra.mxu0 %v64
  %85 = vmatprep.subr.bf16.mxu0 0
  %86 = vmatpush2.bf16.msra.mxu0 0
  %87 = vmatprep.subr.bf16.mxu0 0
  %88 = vmatpush2.bf16.msra.mxu0 0
  %89 = vmatprep.subr.bf16.mxu0 0
  %90 = vmatpush2.bf16.msra.mxu0 0
  %91 = vmatprep.subr.bf16.mxu0 0
  %92 = vmatpush2.bf16.msra.mxu0 0
  %93 = vmatprep.subr.bf16.mxu0 0
  %94 = vmatpush2.bf16.msra.mxu0 0
  %95 = vmatprep.subr.bf16.mxu0 0
  %96 = vmatpush2.bf16.msra.mxu0 0
  %97 = vmatprep.subr.bf16.mxu0 0
  %98 = vmatpush2.bf16.msra.mxu0 0
  %99 = vmatprep.subr.bf16.mxu0 0
  %100 = vmatpush2.bf16.msra.mxu0 0
  %101 = vmatprep.mubr.bf16.mxu0 0
  %102 = vmatmul.mubr.bf16.gmra.mxu0 %v60
  %v103 = vpop.f32.mrf.mxu0
  %v104 = vadd.f32 %v41, %v103
  %v105 = vpop.f32.mrf.mxu0
  %v106 = vadd.f32 %v45, %v105
  %v107 = vpop.f32.mrf.mxu0
  %v108 = vadd.f32 %v41, %v107
  %v109 = vpop.f32.mrf.mxu0
  %v110 = vadd.f32 %v45, %v109
  %111 = vdwg.mxu0
  %v112 = vmax.f32 %v104, 0.0
  %v113 = vmax.f32 %v106, 0.0
  %v114 = vmax.f32 %v108, 0.0
  %v115 = vmax.f32 %v110, 0.0
  %v116 = vpack.c.bf16 %v114, %v112
  %v117 = vpack.c.bf16 %v115, %v113
  %v118 = vld [vmem:[%s3] sm:$0xf]
  %v119 = vld [vmem:[%s3 + $0x4] sm:$0xf]
  %v120 = vld [vmem:[%s3 + $0x8] sm:$0xf]
  %v121 = vld [vmem:[%s3 + $0xc] sm:$0xf]
  %v122 = vld [vmem:[%s3 + $0x10] sm:$0xf]
  %v123 = vld [vmem:[%s3 + $0x14] sm:$0xf]
  %v124 = vld [vmem:[%s3 + $0x18] sm:$0xf]
  %v125 = vld [vmem:[%s3 + $0x1c] sm:$0xf]
  %v126 = vld [vmem:[%s3 + $0x20] sm:$0xf]
  %v127 = vld [vmem:[%s3 + $0x24] sm:$0xf]
  %v128 = vld [vmem:[%s3 + $0x28] sm:$0xf]
  %v129 = vld [vmem:[%s3 + $0x2c] sm:$0xf]
  %v130 = vld [vmem:[%s3 + $0x30] sm:$0xf]
  %v131 = vld [vmem:[%s3 + $0x34] sm:$0xf]
  %v132 = vld [vmem:[%s3 + $0x38] sm:$0xf]
  %v133 = vld [vmem:[%s3 + $0x3c] sm:$0xf]
  %v134 = vld [vmem:[%s3 + $0x40] sm:$0xf]
  %v135 = vld [vmem:[%s3 + $0x44] sm:$0xf]
  %v136 = vld [vmem:[%s3 + $0x48] sm:$0xf]
  %v137 = vld [vmem:[%s3 + $0x4c] sm:$0xf]
  %v138 = vld [vmem:[%s3 + $0x50] sm:$0xf]
  %v139 = vld [vmem:[%s3 + $0x54] sm:$0xf]
  %v140 = vld [vmem:[%s3 + $0x58] sm:$0xf]
  %v141 = vld [vmem:[%s3 + $0x5c] sm:$0xf]
  %v142 = vld [vmem:[%s3 + $0x60] sm:$0xf]
  %v143 = vld [vmem:[%s3 + $0x64] sm:$0xf]
  %v144 = vld [vmem:[%s3 + $0x68] sm:$0xf]
  %v145 = vld [vmem:[%s3 + $0x6c] sm:$0xf]
  %v146 = vld [vmem:[%s3 + $0x70] sm:$0xf]
  %v147 = vld [vmem:[%s3 + $0x74] sm:$0xf]
  %v148 = vld [vmem:[%s3 + $0x78] sm:$0xf]
  %v149 = vld [vmem:[%s3 + $0x7c] sm:$0xf]
  %v150 = vld [vmem:[%s4] sm:$0x1]
  %v152 = vlaneseq
  %v153 = vshrl.u32 %v152, 7
  %v154 = vsub.s32 0, %v153
  %v155 = vrot.slane %v150, %v154
  %v189 = vunpack.c.l.b16 %v118
  %v190 = vunpack.c.l.b16 %v119
  %v191 = vunpack.c.l.b16 %v120
  %v192 = vunpack.c.l.b16 %v121
  %v193 = vunpack.c.l.b16 %v122
  %v194 = vunpack.c.l.b16 %v123
  %v195 = vunpack.c.l.b16 %v124
  %v196 = vunpack.c.l.b16 %v125
  %v197 = vunpack.c.l.b16 %v126
  %v198 = vunpack.c.l.b16 %v127
  %v199 = vunpack.c.l.b16 %v128
  %v200 = vunpack.c.l.b16 %v129
  %v201 = vunpack.c.l.b16 %v130
  %v202 = vunpack.c.l.b16 %v131
  %v203 = vunpack.c.l.b16 %v132
  %v204 = vunpack.c.l.b16 %v133
  %v205 = vunpack.c.l.b16 %v134
  %v206 = vunpack.c.l.b16 %v135
  %v207 = vunpack.c.l.b16 %v136
  %v208 = vunpack.c.l.b16 %v137
  %v209 = vunpack.c.l.b16 %v138
  %v210 = vunpack.c.l.b16 %v139
  %v211 = vunpack.c.l.b16 %v140
  %v212 = vunpack.c.l.b16 %v141
  %v213 = vunpack.c.l.b16 %v142
  %v214 = vunpack.c.l.b16 %v143
  %v215 = vunpack.c.l.b16 %v144
  %v216 = vunpack.c.l.b16 %v145
  %v217 = vunpack.c.l.b16 %v146
  %v218 = vunpack.c.l.b16 %v147
  %v219 = vunpack.c.l.b16 %v148
  %v220 = vunpack.c.l.b16 %v149
  %v221 = vpack.c.b16 %v190, %v189
  %v222 = vpack.c.b16 %v192, %v191
  %v223 = vpack.c.b16 %v194, %v193
  %v224 = vpack.c.b16 %v196, %v195
  %v225 = vpack.c.b16 %v198, %v197
  %v226 = vpack.c.b16 %v200, %v199
  %v227 = vpack.c.b16 %v202, %v201
  %v228 = vpack.c.b16 %v204, %v203
  %v229 = vpack.c.b16 %v206, %v205
  %v230 = vpack.c.b16 %v208, %v207
  %v231 = vpack.c.b16 %v210, %v209
  %v232 = vpack.c.b16 %v212, %v211
  %v233 = vpack.c.b16 %v214, %v213
  %v234 = vpack.c.b16 %v216, %v215
  %v235 = vpack.c.b16 %v218, %v217
  %v236 = vpack.c.b16 %v220, %v219
  %253 = vmatprep.subr.bf16.mxu0 0
  %254 = vmatpush1.bf16.msra.mxu0 %v228
  %255 = vmatprep.subr.bf16.mxu0 0
  %256 = vmatpush1.bf16.msra.mxu0 %v227
  %257 = vmatprep.subr.bf16.mxu0 0
  %258 = vmatpush1.bf16.msra.mxu0 %v226
  %259 = vmatprep.subr.bf16.mxu0 0
  %260 = vmatpush1.bf16.msra.mxu0 %v225
  %261 = vmatprep.subr.bf16.mxu0 0
  %262 = vmatpush1.bf16.msra.mxu0 %v224
  %263 = vmatprep.subr.bf16.mxu0 0
  %264 = vmatpush1.bf16.msra.mxu0 %v223
  %265 = vmatprep.subr.bf16.mxu0 0
  %266 = vmatpush1.bf16.msra.mxu0 %v222
  %267 = vmatprep.subr.bf16.mxu0 0
  %268 = vmatpush1.bf16.msra.mxu0 %v221
  %269 = vmatprep.subr.bf16.mxu0 0
  %270 = vmatpush2.bf16.msra.mxu0 %v236
  %271 = vmatprep.subr.bf16.mxu0 0
  %272 = vmatpush2.bf16.msra.mxu0 %v235
  %273 = vmatprep.subr.bf16.mxu0 0
  %274 = vmatpush2.bf16.msra.mxu0 %v234
  %275 = vmatprep.subr.bf16.mxu0 0
  %276 = vmatpush2.bf16.msra.mxu0 %v233
  %277 = vmatprep.subr.bf16.mxu0 0
  %278 = vmatpush2.bf16.msra.mxu0 %v232
  %279 = vmatprep.subr.bf16.mxu0 0
  %280 = vmatpush2.bf16.msra.mxu0 %v231
  %281 = vmatprep.subr.bf16.mxu0 0
  %282 = vmatpush2.bf16.msra.mxu0 %v230
  %283 = vmatprep.subr.bf16.mxu0 0
  %284 = vmatpush2.bf16.msra.mxu0 %v229
  %285 = vmatprep.mubr.bf16.mxu0 %v117
  %286 = vmatmul.mubr.bf16.gmra.mxu0 %v116
  %v287 = vpop.f32.mrf.mxu0
  %v288 = vadd.f32 %v155, %v287
  %v289 = vpop.f32.mrf.mxu0
  %v290 = vpop.f32.mrf.mxu0
  %v291 = vadd.f32 %v155, %v290
  %v292 = vpop.f32.mrf.mxu0
  %293 = vdwg.mxu0
  %v294 = vmax.f32 %v288, 0.0
  %v295 = vmax.f32 %v291, 0.0
  %v296 = vpack.c.bf16 %v295, %v294
  %v297 = vld [vmem:[%s5] sm:$0xf]
  %v298 = vld [vmem:[%s5 + $0x4] sm:$0xf]
  %v299 = vld [vmem:[%s5 + $0x8] sm:$0xf]
  %v300 = vld [vmem:[%s5 + $0xc] sm:$0xf]
  %v301 = vld [vmem:[%s5 + $0x10] sm:$0xf]
  %v302 = vld [vmem:[%s5 + $0x14] sm:$0xf]
  %v303 = vld [vmem:[%s5 + $0x18] sm:$0xf]
  %v304 = vld [vmem:[%s5 + $0x1c] sm:$0xf]
  %v305 = vld [vmem:[%s5 + $0x20] sm:$0xf]
  %v306 = vld [vmem:[%s5 + $0x24] sm:$0xf]
  %v307 = vld [vmem:[%s5 + $0x28] sm:$0xf]
  %v308 = vld [vmem:[%s5 + $0x2c] sm:$0xf]
  %v309 = vld [vmem:[%s5 + $0x30] sm:$0xf]
  %v310 = vld [vmem:[%s5 + $0x34] sm:$0xf]
  %v311 = vld [vmem:[%s5 + $0x38] sm:$0xf]
  %v312 = vld [vmem:[%s5 + $0x3c] sm:$0xf]
  %v313 = vld [vmem:[%s6] sm:$0x1]
  %v315 = vlaneseq
  %v316 = vshrl.u32 %v315, 7
  %v317 = vsub.s32 0, %v316
  %v318 = vrot.slane %v313, %v317
  %v336 = vunpack.c.l.b16 %v297
  %v337 = vunpack.c.l.b16 %v298
  %v338 = vunpack.c.l.b16 %v299
  %v339 = vunpack.c.l.b16 %v300
  %v340 = vunpack.c.l.b16 %v301
  %v341 = vunpack.c.l.b16 %v302
  %v342 = vunpack.c.l.b16 %v303
  %v343 = vunpack.c.l.b16 %v304
  %v344 = vunpack.c.l.b16 %v305
  %v345 = vunpack.c.l.b16 %v306
  %v346 = vunpack.c.l.b16 %v307
  %v347 = vunpack.c.l.b16 %v308
  %v348 = vunpack.c.l.b16 %v309
  %v349 = vunpack.c.l.b16 %v310
  %v350 = vunpack.c.l.b16 %v311
  %v351 = vunpack.c.l.b16 %v312
  %v352 = vpack.c.b16 %v337, %v336
  %v353 = vpack.c.b16 %v339, %v338
  %v354 = vpack.c.b16 %v341, %v340
  %v355 = vpack.c.b16 %v343, %v342
  %v356 = vpack.c.b16 %v345, %v344
  %v357 = vpack.c.b16 %v347, %v346
  %v358 = vpack.c.b16 %v349, %v348
  %v359 = vpack.c.b16 %v351, %v350
  %368 = vmatprep.subr.bf16.mxu0 0
  %369 = vmatpush1.bf16.msra.mxu0 %v359
  %370 = vmatprep.subr.bf16.mxu0 0
  %371 = vmatpush1.bf16.msra.mxu0 %v358
  %372 = vmatprep.subr.bf16.mxu0 0
  %373 = vmatpush1.bf16.msra.mxu0 %v357
  %374 = vmatprep.subr.bf16.mxu0 0
  %375 = vmatpush1.bf16.msra.mxu0 %v356
  %376 = vmatprep.subr.bf16.mxu0 0
  %377 = vmatpush1.bf16.msra.mxu0 %v355
  %378 = vmatprep.subr.bf16.mxu0 0
  %379 = vmatpush1.bf16.msra.mxu0 %v354
  %380 = vmatprep.subr.bf16.mxu0 0
  %381 = vmatpush1.bf16.msra.mxu0 %v353
  %382 = vmatprep.subr.bf16.mxu0 0
  %383 = vmatpush1.bf16.msra.mxu0 %v352
  %384 = vmatprep.subr.bf16.mxu0 0
  %385 = vmatpush2.bf16.msra.mxu0 0
  %386 = vmatprep.subr.bf16.mxu0 0
  %387 = vmatpush2.bf16.msra.mxu0 0
  %388 = vmatprep.subr.bf16.mxu0 0
  %389 = vmatpush2.bf16.msra.mxu0 0
  %390 = vmatprep.subr.bf16.mxu0 0
  %391 = vmatpush2.bf16.msra.mxu0 0
  %392 = vmatprep.subr.bf16.mxu0 0
  %393 = vmatpush2.bf16.msra.mxu0 0
  %394 = vmatprep.subr.bf16.mxu0 0
  %395 = vmatpush2.bf16.msra.mxu0 0
  %396 = vmatprep.subr.bf16.mxu0 0
  %397 = vmatpush2.bf16.msra.mxu0 0
  %398 = vmatprep.subr.bf16.mxu0 0
  %399 = vmatpush2.bf16.msra.mxu0 0
  %400 = vmatprep.mubr.bf16.mxu0 0
  %401 = vmatmul.mubr.bf16.gmra.mxu0 %v296
  %v402 = vpop.f32.mrf.mxu0
  %v403 = vadd.f32 %v318, %v402
  %v404 = vpop.f32.mrf.mxu0
  %v405 = vpop.f32.mrf.mxu0
  %v406 = vadd.f32 %v318, %v405
  %v407 = vpop.f32.mrf.mxu0
  %408 = vdwg.mxu0
  %v409 = vmax.f32 %v403, 0.0
  %v410 = vmax.f32 %v406, 0.0
  %v411 = vpack.c.bf16 %v410, %v409
  %v412 = vld [vmem:[%s7] sm:$0xf]
  %v413 = vld [vmem:[%s7 + $0x4] sm:$0xf]
  %v414 = vld [vmem:[%s7 + $0x8] sm:$0xf]
  %v415 = vld [vmem:[%s7 + $0xc] sm:$0xf]
  %v416 = vld [vmem:[%s7 + $0x10] sm:$0xf]
  %v417 = vld [vmem:[%s7 + $0x14] sm:$0xf]
  %v418 = vld [vmem:[%s7 + $0x18] sm:$0xf]
  %v419 = vld [vmem:[%s7 + $0x1c] sm:$0xf]
  %v420 = vld [vmem:[%s8] sm:$0x1]
  %v422 = vlaneseq
  %v423 = vshrl.u32 %v422, 7
  %v424 = vsub.s32 0, %v423
  %v425 = vrot.slane %v420, %v424
  %v435 = vunpack.c.l.b16 %v412
  %v436 = vunpack.c.l.b16 %v413
  %v437 = vunpack.c.l.b16 %v414
  %v438 = vunpack.c.l.b16 %v415
  %v439 = vunpack.c.l.b16 %v416
  %v440 = vunpack.c.l.b16 %v417
  %v441 = vunpack.c.l.b16 %v418
  %v442 = vunpack.c.l.b16 %v419
  %v443 = vpack.c.b16 %v436, %v435
  %v444 = vpack.c.b16 %v438, %v437
  %v445 = vpack.c.b16 %v440, %v439
  %v446 = vpack.c.b16 %v442, %v441
  %vm451 = vcmask 523264
  %v453 = vsel %vm451, %v411, 0
  %455 = vmatprep.subr.bf16.mxu0 0
  %456 = vmatpush1.bf16.msra.mxu0 0
  %457 = vmatprep.subr.bf16.mxu0 0
  %458 = vmatpush1.bf16.msra.mxu0 0
  %459 = vmatprep.subr.bf16.mxu0 0
  %460 = vmatpush1.bf16.msra.mxu0 0
  %461 = vmatprep.subr.bf16.mxu0 0
  %462 = vmatpush1.bf16.msra.mxu0 0
  %463 = vmatprep.subr.bf16.mxu0 0
  %464 = vmatpush1.bf16.msra.mxu0 %v446
  %465 = vmatprep.subr.bf16.mxu0 0
  %466 = vmatpush1.bf16.msra.mxu0 %v445
  %467 = vmatprep.subr.bf16.mxu0 0
  %468 = vmatpush1.bf16.msra.mxu0 %v444
  %469 = vmatprep.subr.bf16.mxu0 0
  %470 = vmatpush1.bf16.msra.mxu0 %v443
  %471 = vmatprep.subr.bf16.mxu0 0
  %472 = vmatpush2.bf16.msra.mxu0 0
  %473 = vmatprep.subr.bf16.mxu0 0
  %474 = vmatpush2.bf16.msra.mxu0 0
  %475 = vmatprep.subr.bf16.mxu0 0
  %476 = vmatpush2.bf16.msra.mxu0 0
  %477 = vmatprep.subr.bf16.mxu0 0
  %478 = vmatpush2.bf16.msra.mxu0 0
  %479 = vmatprep.subr.bf16.mxu0 0
  %480 = vmatpush2.bf16.msra.mxu0 0
  %481 = vmatprep.subr.bf16.mxu0 0
  %482 = vmatpush2.bf16.msra.mxu0 0
  %483 = vmatprep.subr.bf16.mxu0 0
  %484 = vmatpush2.bf16.msra.mxu0 0
  %485 = vmatprep.subr.bf16.mxu0 0
  %486 = vmatpush2.bf16.msra.mxu0 0
  %487 = vmatprep.mubr.bf16.mxu0 0
  %488 = vmatmul.mubr.bf16.gmra.mxu0 %v453
  %v489 = vpop.f32.mrf.mxu0
  %v490 = vadd.f32 %v425, %v489
  %v491 = vpop.f32.mrf.mxu0
  %v492 = vpop.f32.mrf.mxu0
  %v493 = vadd.f32 %v425, %v492
  %v494 = vpop.f32.mrf.mxu0
  %495 = vdwg.mxu0
  %496 = vst.msk [vmem:[%s9] sm:$0xff] %vm58, %v490
  %497 = vst.msk [vmem:[%s9 + $0x8] sm:$0xff] %vm58, %v493
  // Predicated region
  $region38: #{tpu_custom_call.1} parent=0 // pred_check
    _
  $region39: #{tpu_custom_call.1} parent=0 // pred_check_branch
    %499 = sbr.rel (0) target = $region41
  $region40: #{tpu_custom_call.1} parent=0 // pred_region
    _
  $region41: #{tpu_custom_call.1} parent=0 // pred_fallthru
    _
  // Predicated region
  $region42: #{tpu_custom_call.1} parent=0 // pred_check
    _
  $region43: #{tpu_custom_call.1} parent=0 // pred_check_branch
    %501 = sbr.rel (0) target = $region45
  $region44: #{tpu_custom_call.1} parent=0 // pred_region
    _
  $region45: #{tpu_custom_call.1} parent=0 // pred_fallthru
    _

</llo_original>
